<compile_context>
chip_gen: v7x
topology: tpu7x:2x2x1
jax: 0.10.0
libtpu: 0.0.40
codegen_flags: <defaults>
</compile_context>

<pallas_src>
import functools
import math

import numpy as np
import jax
import jax.numpy as jnp
from jax.experimental import pallas as pl
from jax.experimental.pallas import tpu as pltpu

PI = math.pi


# --------------------- filter construction (host-side, cached) ---------------

def _get_fourier_filter(size: int) -> np.ndarray:
    """Mirror of AbstractFilter._get_fourier_filter (returns 2 * fft(f))."""
    n = np.concatenate([np.arange(1, size // 2 + 1, 2),
                        np.arange(size // 2 - 1, 0, -2)]).astype(np.float64)
    f = np.zeros(size, dtype=np.float64)
    f[0] = 0.25
    f[1::2] = -1.0 / (PI * n) ** 2
    return 2.0 * np.fft.fft(f)


def create_filter(f: np.ndarray) -> np.ndarray:
    # TODO(synk): AbstractFilter.create_filter is abstract (raises
    # NotImplementedError); we instantiate the canonical RampFilter (identity).
    return f


def _padded_size(input_size: int) -> int:
    return max(64, int(2 ** math.ceil(math.log2(2 * input_size))))


@functools.lru_cache(maxsize=None)
def build_filter_matrix(input_size: int) -> np.ndarray:
    """Dense (H, H) operator equivalent to FFT-filter-IFFT-crop along H."""
    n_pad = _padded_size(input_size)
    fourier_filter = create_filter(_get_fourier_filter(n_pad))
    g = np.real(np.fft.ifft(fourier_filter)).astype(np.float32)  # (n_pad,)
    h = np.arange(input_size)[:, None]
    k = np.arange(input_size)[None, :]
    return np.ascontiguousarray(g[(h - k) % n_pad])              # (H, H)


# ------------------------------ Pallas kernel ---------------------------------

def _filter_matmul_kernel(m_ref, x_ref, o_ref, acc_ref):
    # m_ref: (tm, tk) bf16 filter tile; x_ref: (tk, tn) bf16 data panel;
    # o_ref: (tm, tn) output tile; acc_ref: (tm, tn) f32 accumulator.
    @pl.when(pl.program_id(2) == 0)
    def _init():
        acc_ref[...] = jnp.zeros_like(acc_ref)

    acc_ref[...] += jnp.dot(m_ref[...], x_ref[...],
                            preferred_element_type=jnp.float32)

    @pl.when(pl.program_id(2) == pl.num_programs(2) - 1)
    def _store():
        o_ref[...] = acc_ref[...].astype(o_ref.dtype)


def _round_up(v: int, m: int) -> int:
    return (v + m - 1) // m * m


@jax.jit
def abstract_filter_forward(x: jnp.ndarray) -> jnp.ndarray:
    # layout: x is NCHW (B, C, H, W) exactly like the PyTorch module; the ramp
    # filtering is applied along H (dim 2), independently per (B, C, W).
    B, C, H, W = x.shape
    out_dtype = x.dtype

    M = jnp.asarray(build_filter_matrix(H))            # (H, H) f32, host-cached

    # Lane-dense flattening: H is the contraction dim, B*C*W rides the lanes.
    N = B * C * W
    x2 = jnp.transpose(x, (2, 0, 1, 3)).reshape(H, N)

    # ---- tile selection ----
    if H <= 256:
        tm = tk = H                      # full-dim blocks, single K step
        Hp = H
    else:
        tm = tk = 256                    # K/M tiling keeps VMEM small (v7x)
        Hp = _round_up(H, 256)
    tn = min(1024, _round_up(N, 128))    # big lane tiles amortize grid overhead
    Np = _round_up(N, tn)

    # bf16 MXU inputs, f32 accumulation; casting in the (jitted) wrapper halves
    # HBM traffic and the double-buffered VMEM input tiles.
    x2 = x2.astype(jnp.bfloat16)
    Mb = M.astype(jnp.bfloat16)
    if Hp != H or Np != N:
        x2 = jnp.pad(x2, ((0, Hp - H), (0, Np - N)))
    if Hp != H:
        Mb = jnp.pad(Mb, ((0, Hp - H), (0, Hp - H)))

    grid = (Np // tn, Hp // tm, Hp // tk)   # (lanes, rows, contraction-last)

    out = pl.pallas_call(
        _filter_matmul_kernel,
        out_shape=jax.ShapeDtypeStruct((Hp, Np), out_dtype),
        grid_spec=pltpu.PrefetchScalarGridSpec(
            num_scalar_prefetch=0,
            grid=grid,
            in_specs=[
                pl.BlockSpec((tm, tk), lambda j, i, k: (i, k)),   # filter matrix
                pl.BlockSpec((tk, tn), lambda j, i, k: (k, j)),   # data panel
            ],
            out_specs=pl.BlockSpec((tm, tn), lambda j, i, k: (i, j)),
            scratch_shapes=[pltpu.VMEM((tm, tn), jnp.float32)],
        ),
        compiler_params=pltpu.CompilerParams(
            dimension_semantics=("parallel", "parallel", "arbitrary"),
            vmem_limit_bytes=32 * 1024 * 1024,
        ),
        cost_estimate=pl.CostEstimate(
            flops=2 * Hp * Hp * Np,
            transcendentals=0,
            bytes_accessed=2 * Hp * Hp + 2 * Hp * Np + 4 * Hp * Np,
        ),
    )(Mb, x2)

    out = out[:H, :N].reshape(H, B, C, W)
    return jnp.transpose(out, (1, 2, 0, 3)).astype(out_dtype)


# --------------------- pure-JAX reference (for verification) -----------------

def _reference_forward(x: jnp.ndarray) -> jnp.ndarray:
    B, C, H, W = x.shape
    n_pad = _padded_size(H)
    xp = jnp.pad(x, ((0, 0), (0, 0), (0, n_pad - H), (0, 0)))
    ff = jnp.asarray(
        create_filter(_get_fourier_filter(n_pad)).astype(np.complex64))
    proj = jnp.fft.fft(jnp.swapaxes(xp, 2, 3), axis=-1) * ff[None, None, None, :]
    res = jnp.real(jnp.fft.ifft(proj, axis=-1))
    return jnp.swapaxes(res, 2, 3)[:, :, :H, :]


# ----------------------------- main ------------------------------------------

if __name__ == "__main__":
    key = jax.random.PRNGKey(0)
    x = jax.random.normal(key, (2, 4, 16, 16), dtype=jnp.float32)

    out = jax.block_until_ready(abstract_filter_forward(x))
    ref = _reference_forward(x)

    assert out.shape == ref.shape == (2, 4, 16, 16)
    assert out.dtype == x.dtype
    # bf16 MXU inputs with f32 accumulation: worst-case rounding ~ 2^-8 * sum|M||x|,
    # well under 2e-2 for this filter (row abs-sum ~1) on N(0,1) data.
    err = float(jnp.max(jnp.abs(out - ref)))
    assert err < 2e-2, f"mismatch vs FFT reference: max abs err = {err}"

    print("KERNEL_OK")
</pallas_src>

<mosaic_0001>
module attributes {stable_mosaic.version = 11 : i64} {
  func.func @_filter_matmul_kernel(%arg0: i32, %arg1: i32, %arg2: i32, %arg3: memref<16x16xbf16, #tpu.memory_space<vmem>>, %arg4: memref<16x128xbf16, #tpu.memory_space<vmem>>, %arg5: memref<16x128xf32, #tpu.memory_space<vmem>>, %arg6: memref<16x128xf32, #tpu.memory_space<vmem>>) attributes {dimension_semantics = [#tpu.dimension_semantics<parallel>, #tpu.dimension_semantics<parallel>, #tpu.dimension_semantics<arbitrary>], iteration_bounds = array<i64: 1, 1, 1>, scalar_prefetch = 0 : i64, scratch_operands = 1 : i64, tpu.core_type = #tpu.core_type<tc>, window_params = [{transform_indices = @transform_0, window_bounds = array<i64: 16, 16>}, {transform_indices = @transform_1, window_bounds = array<i64: 16, 128>}, {transform_indices = @transform_2, window_bounds = array<i64: 16, 128>}]} {
    %c0_i32 = arith.constant 0 : i32
    %0 = arith.cmpi eq, %arg2, %c0_i32 : i32
    %1 = arith.extui %0 : i1 to i32
    %c0_i32_0 = arith.constant 0 : i32
    %2 = arith.cmpi ne, %1, %c0_i32_0 : i32
    scf.if %2 {
      %cst_10 = arith.constant 0.000000e+00 : f32
      %12 = vector.broadcast %cst_10 : f32 to vector<16x128xf32>
      %c0_11 = arith.constant 0 : index
      %c0_12 = arith.constant 0 : index
      %13 = vector.load %arg6[%c0_11, %c0_12] : memref<16x128xf32, #tpu.memory_space<vmem>>, vector<16x128xf32>
      tpu.vector_store %arg6[%c0_11, %c0_12], %12 {strides = array<i32>} : memref<16x128xf32, #tpu.memory_space<vmem>>, vector<16x128xf32>,
    } else {
    }
    %c0 = arith.constant 0 : index
    %c0_1 = arith.constant 0 : index
    %3 = vector.load %arg6[%c0, %c0_1] : memref<16x128xf32, #tpu.memory_space<vmem>>, vector<16x128xf32>
    %c0_2 = arith.constant 0 : index
    %c0_3 = arith.constant 0 : index
    %4 = vector.load %arg3[%c0_2, %c0_3] : memref<16x16xbf16, #tpu.memory_space<vmem>>, vector<16x16xbf16>
    %c0_4 = arith.constant 0 : index
    %c0_5 = arith.constant 0 : index
    %5 = vector.load %arg4[%c0_4, %c0_5] : memref<16x128xbf16, #tpu.memory_space<vmem>>, vector<16x128xbf16>
    %cst = arith.constant dense<0.000000e+00> : vector<16x128xf32>
    %6 = tpu.matmul %4, %5, %cst {dimension_numbers = #tpu.dot_dimension_numbers<[1], [0], [0], [1], [0, 0, 1, 1], [], []>} : vector<16x16xbf16>, vector<16x128xbf16>, vector<16x128xf32> -> vector<16x128xf32>
    %7 = arith.addf %3, %6 : vector<16x128xf32>
    %c0_6 = arith.constant 0 : index
    %c0_7 = arith.constant 0 : index
    %8 = vector.load %arg6[%c0_6, %c0_7] : memref<16x128xf32, #tpu.memory_space<vmem>>, vector<16x128xf32>
    tpu.vector_store %arg6[%c0_6, %c0_7], %7 {strides = array<i32>} : memref<16x128xf32, #tpu.memory_space<vmem>>, vector<16x128xf32>,
    %c0_i32_8 = arith.constant 0 : i32
    %9 = arith.cmpi eq, %arg2, %c0_i32_8 : i32
    %10 = arith.extui %9 : i1 to i32
    %c0_i32_9 = arith.constant 0 : i32
    %11 = arith.cmpi ne, %10, %c0_i32_9 : i32
    scf.if %11 {
      %c0_10 = arith.constant 0 : index
      %c0_11 = arith.constant 0 : index
      %12 = vector.load %arg6[%c0_10, %c0_11] : memref<16x128xf32, #tpu.memory_space<vmem>>, vector<16x128xf32>
      %c0_12 = arith.constant 0 : index
      %c0_13 = arith.constant 0 : index
      %13 = vector.load %arg5[%c0_12, %c0_13] : memref<16x128xf32, #tpu.memory_space<vmem>>, vector<16x128xf32>
      tpu.vector_store %arg5[%c0_12, %c0_13], %12 {strides = array<i32>} : memref<16x128xf32, #tpu.memory_space<vmem>>, vector<16x128xf32>,
    } else {
    }
    return
  }
  func.func @transform_0(%arg0: i32, %arg1: i32, %arg2: i32) -> (i32, i32) {
    %c0_i32 = arith.constant 0 : i32
    return %arg1, %arg2 : i32, i32
  }
  func.func @transform_1(%arg0: i32, %arg1: i32, %arg2: i32) -> (i32, i32) {
    %c0_i32 = arith.constant 0 : i32
    return %arg2, %arg0 : i32, i32
  }
  func.func @transform_2(%arg0: i32, %arg1: i32, %arg2: i32) -> (i32, i32) {
    %c0_i32 = arith.constant 0 : i32
    return %arg1, %arg0 : i32, i32
  }
}

</mosaic_0001>

<llo_original>
// kernel: abstract_filter_forward.1
$region0: #{abstract_filter_forward.1}
  #allocation0 [shape = 'u32[]', space=smem, size = 0x4, offset = 0x4, fixed_abs, tag = 'smem constant byte address 0x4 - core index']
  #allocation1 [shape = 'u32[144,128]{1,0:T(1,128)}', space=vmem, size = 0x12000, scoped, tag = 'internal scratch']
  #allocation2 [shape = 'f32[16,128]{1,0:T(8,128)}', space=vmem, size = 0x2000, scoped, tag = 'scratch operand']
  %s0 = inlined_call_operand.vmem [shape: bf16[16,16], index: 0, kind: input, shape index: {}]
  %s1 = inlined_call_operand.vmem [shape: bf16[16,128], index: 1, kind: input, shape index: {}]
  %s2 = inlined_call_operand.vmem [shape: f32[16,128], index: 2, kind: output, shape index: {}]
  %s3 = sld [smem:[#allocation0]]
  $region26: #{abstract_filter_forward.1} parent=0
    _
  %s5 = ssub.s32 1, %s3
  %s6 = scalar_select 0, %s5, %s3
  // Predicated region
  $region2: #{abstract_filter_forward.1} parent=0 // pred_check
    _
  $region3: #{abstract_filter_forward.1} parent=0 // pred_check_branch
    %8 = sbr.rel (0) target = $region5
  $region4: #{abstract_filter_forward.1} parent=0 // pred_region
    _
  $region5: #{abstract_filter_forward.1} parent=0 // pred_fallthru
    _
  // Predicated region
  $region6: #{abstract_filter_forward.1} parent=0 // pred_check
    _
  $region7: #{abstract_filter_forward.1} parent=0 // pred_check_branch
    %10 = sbr.rel (0) target = $region9
  $region8: #{abstract_filter_forward.1} parent=0 // pred_region
    _
  $region9: #{abstract_filter_forward.1} parent=0 // pred_fallthru
    _
  %p12 = scmp.eq.s32.totalorder 0, 0
  // Predicated region
  $region10: #{abstract_filter_forward.1} parent=0 // pred_check
    %p13 = pneg %p12
  $region11: #{abstract_filter_forward.1} parent=0 // pred_check_branch
    %15 = sbr.rel (%p13) target = $region13
  $region12: #{abstract_filter_forward.1} parent=0 // pred_region
    %16 = vst [vmem:[#allocation2] sm:$0xff] 0.0
    %17 = vst [vmem:[#allocation2 + $0x8] sm:$0xff] 0.0
  $region13: #{abstract_filter_forward.1} parent=0 // pred_fallthru
    _
  %v18 = vld [vmem:[#allocation2] sm:$0xff]
  %v19 = vld [vmem:[#allocation2 + $0x8] sm:$0xff]
  %v20 = vld [vmem:[%s0] sm:$0xf]
  %v21 = vld [vmem:[%s0 + $0x4] sm:$0xf]
  %v22 = vld [vmem:[%s1] sm:$0xf]
  %v23 = vld [vmem:[%s1 + $0x4] sm:$0xf]
  %v26 = vunpack.c.l.b16 %v20
  %v27 = vunpack.c.l.b16 %v21
  %v28 = vpack.c.b16 %v27, %v26
  %v31 = vunpack.c.l.b16 %v22
  %v32 = vunpack.c.l.b16 %v23
  %v33 = vpack.c.b16 %v32, %v31
  %vm35 = vcmask 130048
  %v37 = vsel %vm35, %v28, 0
  %39 = vmatprep.subr.bf16.mxu0 0
  %40 = vmatpush1.bf16.msra.mxu0 %v33
  %41 = vmatprep.subr.bf16.mxu0 0
  %42 = vmatpush1.bf16.msra.mxu0 0
  %43 = vmatprep.subr.bf16.mxu0 0
  %44 = vmatpush1.bf16.msra.mxu0 0
  %45 = vmatprep.subr.bf16.mxu0 0
  %46 = vmatpush1.bf16.msra.mxu0 0
  %47 = vmatprep.subr.bf16.mxu0 0
  %48 = vmatpush1.bf16.msra.mxu0 0
  %49 = vmatprep.subr.bf16.mxu0 0
  %50 = vmatpush1.bf16.msra.mxu0 0
  %51 = vmatprep.subr.bf16.mxu0 0
  %52 = vmatpush1.bf16.msra.mxu0 0
  %53 = vmatprep.subr.bf16.mxu0 0
  %54 = vmatpush1.bf16.msra.mxu0 0
  %55 = vmatprep.subr.bf16.mxu0 0
  %56 = vmatpush1.bf16.msra.mxu0 0
  %57 = vmatprep.subr.bf16.mxu0 0
  %58 = vmatpush1.bf16.msra.mxu0 0
  %59 = vmatprep.subr.bf16.mxu0 0
  %60 = vmatpush1.bf16.msra.mxu0 0
  %61 = vmatprep.subr.bf16.mxu0 0
  %62 = vmatpush1.bf16.msra.mxu0 0
  %63 = vmatprep.subr.bf16.mxu0 0
  %64 = vmatpush1.bf16.msra.mxu0 0
  %65 = vmatprep.subr.bf16.mxu0 0
  %66 = vmatpush1.bf16.msra.mxu0 0
  %67 = vmatprep.subr.bf16.mxu0 0
  %68 = vmatpush1.bf16.msra.mxu0 0
  %69 = vmatprep.subr.bf16.mxu0 0
  %70 = vmatpush1.bf16.msra.mxu0 0
  %71 = vmatprep.mubr.bf16.mxu0 0
  %72 = vmatmul.mubr.bf16.gmra.mrb[0].mxu0 %v37
  %v73 = vpop.f32.mrb[0].mxu0
  %v74 = vadd.f32 0.0, %v73
  %v75 = vpop.f32.mrb[0].mxu0
  %v76 = vpop.f32.mrb[0].mxu0
  %v77 = vadd.f32 0.0, %v76
  %v78 = vpop.f32.mrb[0].mxu0
  %79 = vdwg.mxu0
  %v80 = vadd.f32 %v18, %v74
  %v81 = vadd.f32 %v19, %v77
  %82 = vst [vmem:[#allocation2] sm:$0xff] %v80
  %83 = vst [vmem:[#allocation2 + $0x8] sm:$0xff] %v81
  // Predicated region
  $region14: #{abstract_filter_forward.1} parent=0 // pred_check
    %p84 = pneg %p12
  $region15: #{abstract_filter_forward.1} parent=0 // pred_check_branch
    %86 = sbr.rel (%p84) target = $region17
  $region16: #{abstract_filter_forward.1} parent=0 // pred_region
    %v87 = vld [vmem:[#allocation2] sm:$0xff]
    %v88 = vld [vmem:[#allocation2 + $0x8] sm:$0xff]
    %89 = vst [vmem:[%s2] sm:$0xff] %v87
    %90 = vst [vmem:[%s2 + $0x8] sm:$0xff] %v88
  $region17: #{abstract_filter_forward.1} parent=0 // pred_fallthru
    _
  // Predicated region
  $region18: #{abstract_filter_forward.1} parent=0 // pred_check
    _
  $region19: #{abstract_filter_forward.1} parent=0 // pred_check_branch
    %92 = sbr.rel (0) target = $region21
  $region20: #{abstract_filter_forward.1} parent=0 // pred_region
    _
  $region21: #{abstract_filter_forward.1} parent=0 // pred_fallthru
    _
  // Predicated region
  $region22: #{abstract_filter_forward.1} parent=0 // pred_check
    _
  $region23: #{abstract_filter_forward.1} parent=0 // pred_check_branch
    %94 = sbr.rel (0) target = $region25
  $region24: #{abstract_filter_forward.1} parent=0 // pred_region
    _
  $region25: #{abstract_filter_forward.1} parent=0 // pred_fallthru
    _

</llo_original>
